<compile_context>
chip_gen: v7x
topology: tpu7x:2x2x1
jax: 0.10.0
libtpu: 0.0.40
codegen_flags: <defaults>
</compile_context>

<pallas_src>
import functools

import numpy as np
import jax
import jax.numpy as jnp
from jax.experimental import pallas as pl
from jax.experimental.pallas import tpu as pltpu


def _round_up(x, m):
    return (x + m - 1) // m * m


def _ffm_kernel(num_fields, vocab, embed_dim, pairs, idx_ref, emb_ref, out_ref):
    """One batch tile.

    idx_ref : (TB, F)     int32  VMEM  (x + per-field offsets)
    emb_ref : (3, V, F*D) bf16   VMEM  hi/mid/lo bf16 split of the f32 tables;
                                       table f lives in columns [f*D, (f+1)*D)
    out_ref : (TB, P*D)   f32    VMEM  pair p lives in columns [p*D, (p+1)*D)
    """
    F, V, D = num_fields, vocab, embed_dim
    tb = idx_ref.shape[0]

    idx = idx_ref[...]                                               # (TB, F) int32
    # Stack the F index columns along sublanes -> (F*TB, 1): one shared one-hot
    # and ONE fused gather matmul per precision slab instead of F separate dots.
    idx_cols = jnp.concatenate([idx[:, c:c + 1] for c in range(F)], axis=0)
    lane_iota = jax.lax.broadcasted_iota(jnp.int32, (F * tb, V), 1)
    onehot = (idx_cols == lane_iota).astype(jnp.bfloat16)            # (F*TB, V)

    # gathered[c*TB + m, f*D:(f+1)*D] == weights[f][idx[m, c]].
    # Three single-pass bf16 MXU dots (hi + mid + lo slabs) reconstruct the f32
    # rows to ~1-2 ulp because the 0/1 one-hot makes each dot an exact row select
    # and the MXU accumulates in f32 -- cheaper than one 6-pass HIGHEST f32 dot.
    gathered = jnp.dot(onehot, emb_ref[0], preferred_element_type=jnp.float32)
    gathered = gathered + jnp.dot(onehot, emb_ref[1],
                                  preferred_element_type=jnp.float32)
    gathered = gathered + jnp.dot(onehot, emb_ref[2],
                                  preferred_element_type=jnp.float32)  # (F*TB, F*D)

    # out[:, p*D:(p+1)*D] = weights[j][idx[:, i]] * weights[i][idx[:, j]] for the
    # p-th pair (i, j).  Build all P products, then a single full-width store
    # (no masked 32-lane partial stores).
    # TODO(synk): for large num_fields (P = F*(F-1)/2 in the hundreds) stage
    # `gathered` in an explicit VMEM scratch and run the pair loop as a
    # lax.fori_loop (or a grid axis) instead of fully unrolling it in Python.
    prods = []
    for (i, j) in pairs:
        a = gathered[i * tb:(i + 1) * tb, j * D:(j + 1) * D]  # weights[j][idx[:, i]]
        b = gathered[j * tb:(j + 1) * tb, i * D:(i + 1) * D]  # weights[i][idx[:, j]]
        prods.append(a * b)
    out_ref[...] = jnp.concatenate(prods, axis=-1).astype(out_ref.dtype)


class FieldAwareFactorizationLayer:
    """JAX/Pallas port of reclib's FieldAwareFactorizationLayer forward pass."""

    _TB_CAP = 512   # max batch rows per grid step (multiple of 8)

    def __init__(self, field_dims, embed_dim, key):
        self.field_dims = tuple(int(d) for d in field_dims)
        self.num_fields = len(self.field_dims)
        self.embed_dim = int(embed_dim)
        self.vocab = int(sum(self.field_dims))
        self.offsets = jnp.asarray(
            np.array((0, *np.cumsum(self.field_dims)[:-1]), dtype=np.int32))
        # Xavier-uniform init for each (V, D) embedding table (as in PyTorch).
        bound = float(np.sqrt(6.0 / (self.vocab + self.embed_dim)))
        self.weights = jax.random.uniform(
            key, (self.num_fields, self.vocab, self.embed_dim), jnp.float32,
            minval=-bound, maxval=bound)
        self.pairs = tuple(
            (i, j) for i in range(self.num_fields - 1)
            for j in range(i + 1, self.num_fields))
        # Precompute (once, not per call): table f in columns [f*D, (f+1)*D) of a
        # (V, F*D) slab, split into hi/mid/lo bf16 slabs whose sum reconstructs
        # the f32 values to ~2^-24 relative.
        V, F, D = self.vocab, self.num_fields, self.embed_dim
        emb = jnp.transpose(self.weights, (1, 0, 2)).reshape(V, F * D)
        hi = emb.astype(jnp.bfloat16)
        r1 = emb - hi.astype(jnp.float32)                 # exact in f32
        mid = r1.astype(jnp.bfloat16)
        lo = (r1 - mid.astype(jnp.float32)).astype(jnp.bfloat16)
        self.emb3 = jnp.stack([hi, mid, lo], axis=0)      # (3, V, F*D) bf16

    def _pick_tile(self, B, block_batch):
        if block_batch is not None:
            return max(8, _round_up(int(block_batch), 8))
        tb = self._TB_CAP
        if B <= 2 * tb:
            # Keep the grid >= 2 steps so the "parallel" batch axis spans both
            # TensorCores on v7x (no effect on single-TC v5e/v6e).
            tb = max(8, _round_up(-(-B // 2), 8))
        return tb

    def _vmem_limit_bytes(self, tb):
        F, D, V, P = self.num_fields, self.embed_dim, self.vocab, len(self.pairs)
        table = int(self.emb3.size) * 2                   # resident bf16 slab (1x)
        idx_tile = tb * F * 4                             # int32, double-buffered
        out_tile = tb * P * D * 4                         # f32, double-buffered
        # compiler-managed intermediates: one-hot (bf16), gathered (f32), products
        interm = F * tb * max(V, 128) * 2 + F * tb * F * D * 4 + tb * P * D * 4
        need = table + 2 * idx_tile + 2 * out_tile + 2 * interm + (8 << 20)
        try:
            cap = pltpu.get_tpu_info().vmem_capacity_bytes  # 64 MiB/TC v7x, 128 MiB v5e/v6e
        except Exception:
            cap = 64 << 20
        return int(min(max(need, 32 << 20), cap * 7 // 8))

    def __call__(self, x, block_batch=None):
        B, F = x.shape
        assert F == self.num_fields
        D, V = self.embed_dim, self.vocab
        P = len(self.pairs)

        idx = (x.astype(jnp.int32) + self.offsets[None, :]).astype(jnp.int32)

        tb = self._pick_tile(B, block_batch)
        b_pad = _round_up(B, tb)
        if b_pad != B:
            idx = jnp.pad(idx, ((0, b_pad - B), (0, 0)))
        grid = (b_pad // tb,)

        kernel = functools.partial(_ffm_kernel, F, V, D, self.pairs)
        out = pl.pallas_call(
            kernel,
            out_shape=jax.ShapeDtypeStruct((b_pad, P * D), jnp.float32),
            grid=grid,
            in_specs=[
                pl.BlockSpec((tb, F), lambda b: (b, 0)),          # idx batch tile
                # Whole table placed in VMEM once for the whole kernel: single
                # resident copy, no per-grid-step re-DMA / double buffering.
                pl.BlockSpec(memory_space=pltpu.MemorySpace.VMEM),
            ],
            out_specs=pl.BlockSpec((tb, P * D), lambda b: (b, 0)),
            compiler_params=pltpu.CompilerParams(
                dimension_semantics=("parallel",),  # shards batch over v7x's 2 TCs
                vmem_limit_bytes=self._vmem_limit_bytes(tb),
            ),
        )(idx, self.emb3)
        # TODO(synk): for production-sized vocabularies keep the table in HBM
        # (memory_space=pl.ANY), pass idx via PrefetchScalarGridSpec scalar
        # prefetch, and gather rows with manual double-buffered DMA instead of the
        # VMEM-resident one-hot matmul (one-hot FLOPs and the resident slab both
        # scale with V).
        return out[:B].reshape(B, P, D)


def _reference(idx, weights, num_fields):
    """Pure-JAX reference matching the PyTorch forward."""
    xs = [weights[f][idx] for f in range(num_fields)]  # each (B, F, D)
    out = []
    for i in range(num_fields - 1):
        for j in range(i + 1, num_fields):
            out.append(xs[j][:, i] * xs[i][:, j])
    return jnp.stack(out, axis=1)


if __name__ == "__main__":
    key = jax.random.PRNGKey(0)
    k_w, k_x = jax.random.split(key)

    field_dims = (3, 4, 5, 6)   # F = 4 fields, vocab = 18
    embed_dim = 32
    batch = 50                  # non-multiple of tile -> exercises pad + multi-step grid

    layer = FieldAwareFactorizationLayer(field_dims, embed_dim, k_w)

    maxs = jnp.asarray(field_dims, dtype=jnp.int32)
    x = jax.random.randint(k_x, (batch, len(field_dims)), 0, maxs, dtype=jnp.int32)

    idx = (x + layer.offsets[None, :]).astype(jnp.int32)
    ref = _reference(idx, layer.weights, len(field_dims))
    P = len(field_dims) * (len(field_dims) - 1) // 2

    # Default tile heuristic: tb=32 -> grid=(2,) (two "parallel" steps).
    out = jax.block_until_ready(layer(x))
    assert out.shape == (batch, P, embed_dim)
    np.testing.assert_allclose(np.asarray(out), np.asarray(ref), rtol=1e-5, atol=1e-6)

    # Explicit small tile: tb=16 -> grid=(4,), exercises deeper pipelining.
    out2 = jax.block_until_ready(layer(x, block_batch=16))
    np.testing.assert_allclose(np.asarray(out2), np.asarray(ref), rtol=1e-5, atol=1e-6)

    print("KERNEL_OK")
</pallas_src>

<mosaic_0001>
module attributes {stable_mosaic.version = 11 : i64} {
  func.func @_ffm_kernel(%arg0: i32, %arg1: memref<32x4xi32, #tpu.memory_space<vmem>>, %arg2: memref<3x18x128xbf16, #tpu.memory_space<vmem>>, %arg3: memref<32x192xf32, #tpu.memory_space<vmem>>) attributes {dimension_semantics = [#tpu.dimension_semantics<parallel>], iteration_bounds = array<i64: 2>, scalar_prefetch = 0 : i64, scratch_operands = 0 : i64, tpu.core_type = #tpu.core_type<tc>, window_params = [{transform_indices = @transform_0, window_bounds = array<i64: 32, 4>}, {pipeline_mode = #tpu.pipeline_mode<synchronous>, transform_indices = @transform_1, window_bounds = array<i64: 3, 18, 128>}, {transform_indices = @transform_2, window_bounds = array<i64: 32, 192>}]} {
    %c0 = arith.constant 0 : index
    %c0_0 = arith.constant 0 : index
    %0 = vector.load %arg1[%c0, %c0_0] : memref<32x4xi32, #tpu.memory_space<vmem>>, vector<32x4xi32>
    %1 = vector.extract_strided_slice %0 {offsets = [0, 0], sizes = [32, 1], strides = [1, 1]} : vector<32x4xi32> to vector<32x1xi32>
    %2 = vector.extract_strided_slice %0 {offsets = [0, 1], sizes = [32, 1], strides = [1, 1]} : vector<32x4xi32> to vector<32x1xi32>
    %3 = vector.extract_strided_slice %0 {offsets = [0, 2], sizes = [32, 1], strides = [1, 1]} : vector<32x4xi32> to vector<32x1xi32>
    %4 = vector.extract_strided_slice %0 {offsets = [0, 3], sizes = [32, 1], strides = [1, 1]} : vector<32x4xi32> to vector<32x1xi32>
    %5 = tpu.concatenate %1, %2, %3, %4 in 0 : vector<32x1xi32>, vector<32x1xi32>, vector<32x1xi32>, vector<32x1xi32> -> vector<128x1xi32>
    %6 = tpu.iota {dimensions = array<i32: 1>} : vector<128x18xi32>
    %7 = vector.broadcast %5 : vector<128x1xi32> to vector<128x18xi32>
    %8 = arith.cmpi eq, %7, %6 : vector<128x18xi32>
    %9 = arith.extui %8 : vector<128x18xi1> to vector<128x18xi32>
    %10 = arith.sitofp %9 : vector<128x18xi32> to vector<128x18xf32>
    %11 = arith.truncf %10 : vector<128x18xf32> to vector<128x18xbf16>
    %c0_1 = arith.constant 0 : index
    %c0_2 = arith.constant 0 : index
    %c0_3 = arith.constant 0 : index
    %12 = vector.load %arg2[%c0_1, %c0_2, %c0_3] : memref<3x18x128xbf16, #tpu.memory_space<vmem>>, vector<1x18x128xbf16>
    %13 = vector.shape_cast %12 : vector<1x18x128xbf16> to vector<18x128xbf16>
    %cst = arith.constant dense<0.000000e+00> : vector<128x128xf32>
    %14 = tpu.matmul %11, %13, %cst {dimension_numbers = #tpu.dot_dimension_numbers<[1], [0], [0], [1], [0, 0, 1, 1], [], []>} : vector<128x18xbf16>, vector<18x128xbf16>, vector<128x128xf32> -> vector<128x128xf32>
    %c1 = arith.constant 1 : index
    %c0_4 = arith.constant 0 : index
    %c0_5 = arith.constant 0 : index
    %15 = vector.load %arg2[%c1, %c0_4, %c0_5] : memref<3x18x128xbf16, #tpu.memory_space<vmem>>, vector<1x18x128xbf16>
    %16 = vector.shape_cast %15 : vector<1x18x128xbf16> to vector<18x128xbf16>
    %cst_6 = arith.constant dense<0.000000e+00> : vector<128x128xf32>
    %17 = tpu.matmul %11, %16, %cst_6 {dimension_numbers = #tpu.dot_dimension_numbers<[1], [0], [0], [1], [0, 0, 1, 1], [], []>} : vector<128x18xbf16>, vector<18x128xbf16>, vector<128x128xf32> -> vector<128x128xf32>
    %18 = arith.addf %14, %17 : vector<128x128xf32>
    %c2 = arith.constant 2 : index
    %c0_7 = arith.constant 0 : index
    %c0_8 = arith.constant 0 : index
    %19 = vector.load %arg2[%c2, %c0_7, %c0_8] : memref<3x18x128xbf16, #tpu.memory_space<vmem>>, vector<1x18x128xbf16>
    %20 = vector.shape_cast %19 : vector<1x18x128xbf16> to vector<18x128xbf16>
    %cst_9 = arith.constant dense<0.000000e+00> : vector<128x128xf32>
    %21 = tpu.matmul %11, %20, %cst_9 {dimension_numbers = #tpu.dot_dimension_numbers<[1], [0], [0], [1], [0, 0, 1, 1], [], []>} : vector<128x18xbf16>, vector<18x128xbf16>, vector<128x128xf32> -> vector<128x128xf32>
    %22 = arith.addf %18, %21 : vector<128x128xf32>
    %23 = vector.extract_strided_slice %22 {offsets = [0, 32], sizes = [32, 32], strides = [1, 1]} : vector<128x128xf32> to vector<32x32xf32>
    %24 = vector.extract_strided_slice %22 {offsets = [32, 0], sizes = [32, 32], strides = [1, 1]} : vector<128x128xf32> to vector<32x32xf32>
    %25 = arith.mulf %23, %24 : vector<32x32xf32>
    %26 = vector.extract_strided_slice %22 {offsets = [0, 64], sizes = [32, 32], strides = [1, 1]} : vector<128x128xf32> to vector<32x32xf32>
    %27 = vector.extract_strided_slice %22 {offsets = [64, 0], sizes = [32, 32], strides = [1, 1]} : vector<128x128xf32> to vector<32x32xf32>
    %28 = arith.mulf %26, %27 : vector<32x32xf32>
    %29 = vector.extract_strided_slice %22 {offsets = [0, 96], sizes = [32, 32], strides = [1, 1]} : vector<128x128xf32> to vector<32x32xf32>
    %30 = vector.extract_strided_slice %22 {offsets = [96, 0], sizes = [32, 32], strides = [1, 1]} : vector<128x128xf32> to vector<32x32xf32>
    %31 = arith.mulf %29, %30 : vector<32x32xf32>
    %32 = vector.extract_strided_slice %22 {offsets = [32, 64], sizes = [32, 32], strides = [1, 1]} : vector<128x128xf32> to vector<32x32xf32>
    %33 = vector.extract_strided_slice %22 {offsets = [64, 32], sizes = [32, 32], strides = [1, 1]} : vector<128x128xf32> to vector<32x32xf32>
    %34 = arith.mulf %32, %33 : vector<32x32xf32>
    %35 = vector.extract_strided_slice %22 {offsets = [32, 96], sizes = [32, 32], strides = [1, 1]} : vector<128x128xf32> to vector<32x32xf32>
    %36 = vector.extract_strided_slice %22 {offsets = [96, 32], sizes = [32, 32], strides = [1, 1]} : vector<128x128xf32> to vector<32x32xf32>
    %37 = arith.mulf %35, %36 : vector<32x32xf32>
    %38 = vector.extract_strided_slice %22 {offsets = [64, 96], sizes = [32, 32], strides = [1, 1]} : vector<128x128xf32> to vector<32x32xf32>
    %39 = vector.extract_strided_slice %22 {offsets = [96, 64], sizes = [32, 32], strides = [1, 1]} : vector<128x128xf32> to vector<32x32xf32>
    %40 = arith.mulf %38, %39 : vector<32x32xf32>
    %41 = tpu.concatenate %25, %28, %31, %34, %37, %40 in 1 : vector<32x32xf32>, vector<32x32xf32>, vector<32x32xf32>, vector<32x32xf32>, vector<32x32xf32>, vector<32x32xf32> -> vector<32x192xf32>
    %c0_10 = arith.constant 0 : index
    %c0_11 = arith.constant 0 : index
    %42 = vector.load %arg3[%c0_10, %c0_11] : memref<32x192xf32, #tpu.memory_space<vmem>>, vector<32x192xf32>
    tpu.vector_store %arg3[%c0_10, %c0_11], %41 {strides = array<i32>} : memref<32x192xf32, #tpu.memory_space<vmem>>, vector<32x192xf32>,
    return
  }
  func.func @transform_0(%arg0: i32) -> (i32, i32) {
    %c0_i32 = arith.constant 0 : i32
    %c0_i32_0 = arith.constant 0 : i32
    return %arg0, %c0_i32 : i32, i32
  }
  func.func @transform_1(%arg0: i32) -> (i32, i32, i32) {
    %c0_i32 = arith.constant 0 : i32
    %c0_i32_0 = arith.constant 0 : i32
    %c0_i32_1 = arith.constant 0 : i32
    %c0_i32_2 = arith.constant 0 : i32
    return %c0_i32, %c0_i32_0, %c0_i32_1 : i32, i32, i32
  }
  func.func @transform_2(%arg0: i32) -> (i32, i32) {
    %c0_i32 = arith.constant 0 : i32
    %c0_i32_0 = arith.constant 0 : i32
    return %arg0, %c0_i32 : i32, i32
  }
}

</mosaic_0001>

<llo_original>
// kernel: tpu_custom_call.1
$region0: #{tpu_custom_call.1}
  #allocation0 [shape = 'u32[]', space=smem, size = 0x4, offset = 0x4, fixed_abs, tag = 'smem constant byte address 0x4 - core index']
  #allocation1 [shape = 'u32[144,128]{1,0:T(1,128)}', space=vmem, size = 0x12000, scoped, tag = 'internal scratch']
  %s0 = inlined_call_operand.vmem [shape: s32[64,4], index: 0, kind: input, shape index: {}]
  %s1 = inlined_call_operand.vmem [shape: bf16[3,18,128], index: 1, kind: input, shape index: {}]
  %s2 = inlined_call_operand.hbm [shape: f32[64,192], index: 2, kind: output, shape index: {}]
  %s3 = sld [smem:[#allocation0]]
  $region41: #{tpu_custom_call.1} parent=0
    _
  %s5 = ssub.s32 1, %s3
  %s6 = scalar_select 0, %s5, %s3
  $region1: #{tpu_custom_call.1} parent=0
    #allocation2 [shape = 'u8[65536]{0}', space=vmem, size = 0x10000, scoped, tag = 'output window, operand 0']
    #allocation3 [shape = 's32[2]{0}', space=sflag, size = 0x8, scoped, tag = 'scoped memory for tpu_custom_call.1']
    %7 = vsyncpa [#allocation3], 0
    %s8 = scalar_lea.sflag [#allocation3], 1
    %9 = vsyncpa %s8, 0
    loop: start=0, step=1, limit=4
    $region2: #{tpu_custom_call.1} parent=1 // loop_pre_header
      _
    $region3: #{tpu_custom_call.1} parent=1 // loop_header
      %s11 = sphi 0, %s15
      %p12 = scmp.ge.s32.totalorder %s11, 4
      %s21 = sphi 0, %s23
      %s24 = sphi 0, %s21
      %s25 = sphi 0, %s24
      %s41 = sphi 0, %s25
      %s45 = sphi 0, %s45
      %s47 = sphi 0, %s45
      %s48 = sphi 0, %s47
      %s62 = sphi 0, %s48
      %s68 = sphi 0, %s70
      %s71 = sphi 0, %s68
      %s72 = sphi 0, %s71
      %s88 = sphi 0, %s72
    $region4: #{tpu_custom_call.1} parent=1 // loop_header_branch
      %14 = sbr.rel (%p12) target = $region8
    $region5: #{tpu_custom_call.1} parent=1 // loop_body
      %s16 = ssub.s32 %s11, 1
      %s17 = ssub.s32 %s11, 2
      %s18 = sadd.s32 %s11, 1
      %s19 = ssub.s32 %s11, %s18
      %p20 = scmp.eq.s32.totalorder %s19, 0
      %s22 = sadd.s32 %s21, 1
      %s23 = scalar_select %p20, %s21, %s22
      %p26 = pneg %p20
      %p27 = scmp.eq.s32.totalorder %s11, 1
      %p28 = por %p26, %p27
      %p29 = scmp.ne.s32.totalorder %s21, %s24
      %p30 = scmp.eq.s32.totalorder %s11, 0
      %p31 = por %p29, %p30
      %p32 = scmp.ne.s32.totalorder %s21, %s24
      %p33 = scmp.eq.s32.totalorder %s16, 1
      %p34 = por %p32, %p33
      %p35 = scmp.ne.s32.totalorder %s24, %s25
      %p36 = scmp.eq.s32.totalorder %s16, 0
      %p37 = por %p35, %p36
      %p38 = scmp.ne.s32.totalorder %s24, %s25
      %p39 = scmp.eq.s32.totalorder %s17, 1
      %p40 = por %p38, %p39
      %p42 = scmp.ne.s32.totalorder %s25, %s41
      %p43 = scmp.eq.s32.totalorder %s17, 0
      %p44 = por %p42, %p43
      %s46 = sadd.s32 %s45, 1
      %p49 = scmp.eq.s32.totalorder %s11, 1
      %p50 = scmp.ne.s32.totalorder %s45, %s47
      %p51 = scmp.eq.s32.totalorder %s11, 0
      %p52 = por %p50, %p51
      %p53 = scmp.ne.s32.totalorder %s45, %s47
      %p54 = scmp.eq.s32.totalorder %s16, 1
      %p55 = por %p53, %p54
      %p56 = scmp.ne.s32.totalorder %s47, %s48
      %p57 = scmp.eq.s32.totalorder %s16, 0
      %p58 = por %p56, %p57
      %p59 = scmp.ne.s32.totalorder %s47, %s48
      %p60 = scmp.eq.s32.totalorder %s17, 1
      %p61 = por %p59, %p60
      %p63 = scmp.ne.s32.totalorder %s48, %s62
      %p64 = scmp.eq.s32.totalorder %s17, 0
      %p65 = por %p63, %p64
      %s66 = ssub.s32 %s11, %s18
      %p67 = scmp.eq.s32.totalorder %s66, 0
      %s69 = sadd.s32 %s68, 1
      %s70 = scalar_select %p67, %s68, %s69
      %p73 = pneg %p67
      %p74 = scmp.eq.s32.totalorder %s11, 1
      %p75 = por %p73, %p74
      %p76 = scmp.ne.s32.totalorder %s68, %s71
      %p77 = scmp.eq.s32.totalorder %s11, 0
      %p78 = por %p76, %p77
      %p79 = scmp.ne.s32.totalorder %s68, %s71
      %p80 = scmp.eq.s32.totalorder %s16, 1
      %p81 = por %p79, %p80
      %p82 = scmp.ne.s32.totalorder %s71, %s72
      %p83 = scmp.eq.s32.totalorder %s16, 0
      %p84 = por %p82, %p83
      %p85 = scmp.ne.s32.totalorder %s71, %s72
      %p86 = scmp.eq.s32.totalorder %s17, 1
      %p87 = por %p85, %p86
      %p89 = scmp.ne.s32.totalorder %s72, %s88
      %p90 = scmp.eq.s32.totalorder %s17, 0
      %p91 = por %p89, %p90
      %p92 = scmp.le.s32.totalorder 1, %s11
      %p93 = scmp.lt.s32.totalorder %s11, 3
      %p94 = pnand %p92, %p93
      %p95 = pneg %p94
      // Predicated region
      $region9: #{tpu_custom_call.1} parent=5 // pred_check
        _
      $region10: #{tpu_custom_call.1} parent=5 // pred_check_branch
        %97 = sbr.rel (%p94) target = $region12
      $region11: #{tpu_custom_call.1} parent=5 // pred_region
        %s98 = ssub.s32 %s11, 1
        // Predicated region
        $region13: #{tpu_custom_call.1} parent=11 // pred_check
          %p99 = pneg %p58
        $region14: #{tpu_custom_call.1} parent=11 // pred_check_branch
          %101 = sbr.rel (%p99) target = $region16
        $region15: #{tpu_custom_call.1} parent=11 // pred_region
          _
        $region16: #{tpu_custom_call.1} parent=11 // pred_fallthru
          _
      $region12: #{tpu_custom_call.1} parent=5 // pred_fallthru
        _
      %p102 = scmp.lt.s32.totalorder %s11, 2
      // Predicated region
      $region17: #{tpu_custom_call.1} parent=5 // pred_check
        %p103 = pneg %p102
      $region18: #{tpu_custom_call.1} parent=5 // pred_check_branch
        %105 = sbr.rel (%p103) target = $region20
      $region19: #{tpu_custom_call.1} parent=5 // pred_region
        // Predicated region
        $region21: #{tpu_custom_call.1} parent=19 // pred_check
          %p106 = pneg %p31
        $region22: #{tpu_custom_call.1} parent=19 // pred_check_branch
          %108 = sbr.rel (%p106) target = $region24
        $region23: #{tpu_custom_call.1} parent=19 // pred_region
          %s109 = smul.u32 4, %s11
          %p110 = scmp.lt.s32.totalorder %s109, 7
          %s111 = scalar_select %p110, %s109, 7
          %s112 = smul.addr %s111, 8
          %s113 = scalar_lea.vmem %s0, %s112
          %s114 = smul.u32 4, %s11
        $region24: #{tpu_custom_call.1} parent=19 // pred_fallthru
          _
      $region20: #{tpu_custom_call.1} parent=5 // pred_fallthru
        _
      %p115 = scmp.le.s32.totalorder 1, %s11
      %p116 = scmp.lt.s32.totalorder %s11, 3
      %p117 = pnand %p115, %p116
      %p118 = pneg %p117
      // Predicated region
      $region25: #{tpu_custom_call.1} parent=5 // pred_check
        _
      $region26: #{tpu_custom_call.1} parent=5 // pred_check_branch
        %120 = sbr.rel (%p117) target = $region28
      $region27: #{tpu_custom_call.1} parent=5 // pred_region
        %s121 = ssub.s32 %s11, 1
        %s122 = smul.u32 4, %s16
        %p123 = scmp.lt.s32.totalorder %s122, 7
        %s124 = scalar_select %p123, %s122, 7
        %s125 = smul.addr %s124, 8
        %s126 = scalar_lea.vmem %s0, %s125
        %p127 = pneg %p37
        %p128 = pneg %p34
        %p129 = pneg %p58
        %p130 = pneg %p55
        %p131 = pneg %p84
        %p132 = pneg %p81
        %s133 = sand.u32 %s71, 1
        %s134 = scalar_lea.sflag [#allocation3], %s133
        %s135 = sand.u32 %s71, 1
        %s136 = smul.addr %s135, 64
        %s137 = scalar_lea.vmem [#allocation2], %s136
        %s138 = smul.u32 4, %s16
        %p139 = scmp.lt.s32.totalorder %s138, 7
        %s140 = scalar_select %p139, %s138, 7
        %s141 = smul.addr %s140, 8
        %s142 = scalar_lea.vmem %s0, %s141
        %s143 = smul.u32 4, %s16
        %s144 = smul.u32 4, %s16
        %v146 = vld [vmem:[%s142] sm:$0xff]
        %v147 = vld [vmem:[%s142 + $0x8] sm:$0xff]
        %v148 = vld [vmem:[%s142 + $0x10] sm:$0xff]
        %v149 = vld [vmem:[%s142 + $0x18] sm:$0xff]
        %150 = vrot.lane.b32.xlu0 %v146, 127
        %v151 = vpop.permute.xlu0 %150
        %152 = vrot.lane.b32.xlu0 %v147, 127
        %v153 = vpop.permute.xlu0 %152
        %154 = vrot.lane.b32.xlu0 %v148, 127
        %v155 = vpop.permute.xlu0 %154
        %156 = vrot.lane.b32.xlu0 %v149, 127
        %v157 = vpop.permute.xlu0 %156
        %158 = vrot.lane.b32.xlu0 %v146, 126
        %v159 = vpop.permute.xlu0 %158
        %160 = vrot.lane.b32.xlu0 %v147, 126
        %v161 = vpop.permute.xlu0 %160
        %162 = vrot.lane.b32.xlu0 %v148, 126
        %v163 = vpop.permute.xlu0 %162
        %164 = vrot.lane.b32.xlu0 %v149, 126
        %v165 = vpop.permute.xlu0 %164
        %166 = vrot.lane.b32.xlu0 %v146, 125
        %v167 = vpop.permute.xlu0 %166
        %168 = vrot.lane.b32.xlu0 %v147, 125
        %v169 = vpop.permute.xlu0 %168
        %170 = vrot.lane.b32.xlu0 %v148, 125
        %v171 = vpop.permute.xlu0 %170
        %172 = vrot.lane.b32.xlu0 %v149, 125
        %v173 = vpop.permute.xlu0 %172
        %v174 = vlaneseq
        %v175 = vand.u32 %v174, 127
        %176 = vset.pattern.permute.xlu0 0
        %177 = vperm.xlu0 %176, %v146
        %v178 = vpop.permute.xlu0 %177
        %179 = vset.pattern.permute.xlu0 0
        %180 = vperm.xlu0 %179, %v147
        %v181 = vpop.permute.xlu0 %180
        %182 = vset.pattern.permute.xlu0 0
        %183 = vperm.xlu0 %182, %v148
        %v184 = vpop.permute.xlu0 %183
        %185 = vset.pattern.permute.xlu0 0
        %186 = vperm.xlu0 %185, %v149
        %v187 = vpop.permute.xlu0 %186
        %188 = vset.pattern.permute.xlu0 0
        %189 = vperm.xlu0 %188, %v151
        %v190 = vpop.permute.xlu0 %189
        %191 = vset.pattern.permute.xlu0 0
        %192 = vperm.xlu0 %191, %v153
        %v193 = vpop.permute.xlu0 %192
        %194 = vset.pattern.permute.xlu0 0
        %195 = vperm.xlu0 %194, %v155
        %v196 = vpop.permute.xlu0 %195
        %197 = vset.pattern.permute.xlu0 0
        %198 = vperm.xlu0 %197, %v157
        %v199 = vpop.permute.xlu0 %198
        %200 = vset.pattern.permute.xlu0 0
        %201 = vperm.xlu0 %200, %v159
        %v202 = vpop.permute.xlu0 %201
        %203 = vset.pattern.permute.xlu0 0
        %204 = vperm.xlu0 %203, %v161
        %v205 = vpop.permute.xlu0 %204
        %206 = vset.pattern.permute.xlu0 0
        %207 = vperm.xlu0 %206, %v163
        %v208 = vpop.permute.xlu0 %207
        %209 = vset.pattern.permute.xlu0 0
        %210 = vperm.xlu0 %209, %v165
        %v211 = vpop.permute.xlu0 %210
        %212 = vset.pattern.permute.xlu0 0
        %213 = vperm.xlu0 %212, %v167
        %v214 = vpop.permute.xlu0 %213
        %215 = vset.pattern.permute.xlu0 0
        %216 = vperm.xlu0 %215, %v169
        %v217 = vpop.permute.xlu0 %216
        %218 = vset.pattern.permute.xlu0 0
        %219 = vperm.xlu0 %218, %v171
        %v220 = vpop.permute.xlu0 %219
        %221 = vset.pattern.permute.xlu0 0
        %222 = vperm.xlu0 %221, %v173
        %v223 = vpop.permute.xlu0 %222
        %vm224 = vcmp.eq.s32.totalorder %v178, %v175
        %vm225 = vcmp.eq.s32.totalorder %v181, %v175
        %vm226 = vcmp.eq.s32.totalorder %v184, %v175
        %vm227 = vcmp.eq.s32.totalorder %v187, %v175
        %vm228 = vcmp.eq.s32.totalorder %v190, %v175
        %vm229 = vcmp.eq.s32.totalorder %v193, %v175
        %vm230 = vcmp.eq.s32.totalorder %v196, %v175
        %vm231 = vcmp.eq.s32.totalorder %v199, %v175
        %vm232 = vcmp.eq.s32.totalorder %v202, %v175
        %vm233 = vcmp.eq.s32.totalorder %v205, %v175
        %vm234 = vcmp.eq.s32.totalorder %v208, %v175
        %vm235 = vcmp.eq.s32.totalorder %v211, %v175
        %vm236 = vcmp.eq.s32.totalorder %v214, %v175
        %vm237 = vcmp.eq.s32.totalorder %v217, %v175
        %vm238 = vcmp.eq.s32.totalorder %v220, %v175
        %vm239 = vcmp.eq.s32.totalorder %v223, %v175
        %v240 = vsel %vm224, 1, 0
        %v241 = vsel %vm225, 1, 0
        %v242 = vsel %vm226, 1, 0
        %v243 = vsel %vm227, 1, 0
        %v244 = vsel %vm228, 1, 0
        %v245 = vsel %vm229, 1, 0
        %v246 = vsel %vm230, 1, 0
        %v247 = vsel %vm231, 1, 0
        %v248 = vsel %vm232, 1, 0
        %v249 = vsel %vm233, 1, 0
        %v250 = vsel %vm234, 1, 0
        %v251 = vsel %vm235, 1, 0
        %v252 = vsel %vm236, 1, 0
        %v253 = vsel %vm237, 1, 0
        %v254 = vsel %vm238, 1, 0
        %v255 = vsel %vm239, 1, 0
        %v256 = vcvt.s32.f32 %v240
        %v257 = vcvt.s32.f32 %v241
        %v258 = vcvt.s32.f32 %v242
        %v259 = vcvt.s32.f32 %v243
        %v260 = vcvt.s32.f32 %v244
        %v261 = vcvt.s32.f32 %v245
        %v262 = vcvt.s32.f32 %v246
        %v263 = vcvt.s32.f32 %v247
        %v264 = vcvt.s32.f32 %v248
        %v265 = vcvt.s32.f32 %v249
        %v266 = vcvt.s32.f32 %v250
        %v267 = vcvt.s32.f32 %v251
        %v268 = vcvt.s32.f32 %v252
        %v269 = vcvt.s32.f32 %v253
        %v270 = vcvt.s32.f32 %v254
        %v271 = vcvt.s32.f32 %v255
        %v272 = vpack.c.bf16 %v257, %v256
        %v273 = vpack.c.bf16 %v259, %v258
        %v274 = vpack.c.bf16 %v261, %v260
        %v275 = vpack.c.bf16 %v263, %v262
        %v276 = vpack.c.bf16 %v265, %v264
        %v277 = vpack.c.bf16 %v267, %v266
        %v278 = vpack.c.bf16 %v269, %v268
        %v279 = vpack.c.bf16 %v271, %v270
        %v280 = vld [vmem:[%s1] sm:$0xf]
        %v281 = vld [vmem:[%s1 + $0x4] sm:$0xf]
        %v282 = vld [vmem:[%s1 + $0x8] sm:$0x1]
        %s283 = scalar_lea.vmem %s1, 12
        %v284 = vld [vmem:[%s283] sm:$0xf]
        %v285 = vld [vmem:[%s283 + $0x4] sm:$0xf]
        %v286 = vld [vmem:[%s283 + $0x8] sm:$0x1]
        %v290 = vunpack.c.l.b16 %v284
        %v291 = vunpack.c.l.b16 %v285
        %v292 = vunpack.c.l.b16 %v286
        %v293 = vpack.c.b16 %v291, %v290
        %v294 = vpack.c.b16 %v292, %v292
        %vm296 = vcmask 146432
        %v298 = vsel %vm296, %v272, 0
        %v301 = vsel %vm296, %v273, 0
        %v304 = vsel %vm296, %v274, 0
        %v307 = vsel %vm296, %v275, 0
        %v310 = vsel %vm296, %v276, 0
        %v313 = vsel %vm296, %v277, 0
        %v316 = vsel %vm296, %v278, 0
        %v319 = vsel %vm296, %v279, 0
        %vm321 = vcmask 1040384
        %v323 = vsel %vm321, %v294, 0
        %325 = vmatprep.subr.bf16.mxu0 0
        %326 = vmatpush1.bf16.msra.mxu0 %v293
        %327 = vmatprep.subr.bf16.mxu0 0
        %328 = vmatpush1.bf16.msra.mxu0 %v323
        %329 = vmatprep.subr.bf16.mxu0 0
        %330 = vmatpush1.bf16.msra.mxu0 0
        %331 = vmatprep.subr.bf16.mxu0 0
        %332 = vmatpush1.bf16.msra.mxu0 0
        %333 = vmatprep.subr.bf16.mxu0 0
        %334 = vmatpush1.bf16.msra.mxu0 0
        %335 = vmatprep.subr.bf16.mxu0 0
        %336 = vmatpush1.bf16.msra.mxu0 0
        %337 = vmatprep.subr.bf16.mxu0 0
        %338 = vmatpush1.bf16.msra.mxu0 0
        %339 = vmatprep.subr.bf16.mxu0 0
        %340 = vmatpush1.bf16.msra.mxu0 0
        %341 = vmatprep.subr.bf16.mxu0 0
        %342 = vmatpush1.bf16.msra.mxu0 0
        %343 = vmatprep.subr.bf16.mxu0 0
        %344 = vmatpush1.bf16.msra.mxu0 0
        %345 = vmatprep.subr.bf16.mxu0 0
        %346 = vmatpush1.bf16.msra.mxu0 0
        %347 = vmatprep.subr.bf16.mxu0 0
        %348 = vmatpush1.bf16.msra.mxu0 0
        %349 = vmatprep.subr.bf16.mxu0 0
        %350 = vmatpush1.bf16.msra.mxu0 0
        %351 = vmatprep.subr.bf16.mxu0 0
        %352 = vmatpush1.bf16.msra.mxu0 0
        %353 = vmatprep.subr.bf16.mxu0 0
        %354 = vmatpush1.bf16.msra.mxu0 0
        %355 = vmatprep.subr.bf16.mxu0 0
        %356 = vmatpush1.bf16.msra.mxu0 0
        %357 = vmatprep.mubr.bf16.mxu0 0
        %358 = vmatmul.mubr.bf16.gmra.mrb[0].mxu0 %v298
        %v359 = vpop.f32.mrb[0].mxu0
        %v360 = vadd.f32 0.0, %v359
        %v361 = vpop.f32.mrb[0].mxu0
        %v362 = vpop.f32.mrb[0].mxu0
        %v363 = vadd.f32 0.0, %v362
        %v364 = vpop.f32.mrb[0].mxu0
        %365 = vmatprep.mubr.bf16.mxu0 0
        %366 = vmatmul.mubr.bf16.gmra.mrb[0].mxu0 %v301
        %v367 = vpop.f32.mrb[0].mxu0
        %v368 = vadd.f32 0.0, %v367
        %v369 = vpop.f32.mrb[0].mxu0
        %v370 = vpop.f32.mrb[0].mxu0
        %v371 = vadd.f32 0.0, %v370
        %v372 = vpop.f32.mrb[0].mxu0
        %373 = vmatprep.mubr.bf16.mxu0 0
        %374 = vmatmul.mubr.bf16.gmra.mrb[0].mxu0 %v304
        %v375 = vpop.f32.mrb[0].mxu0
        %v376 = vadd.f32 0.0, %v375
        %v377 = vpop.f32.mrb[0].mxu0
        %v378 = vpop.f32.mrb[0].mxu0
        %v379 = vadd.f32 0.0, %v378
        %v380 = vpop.f32.mrb[0].mxu0
        %381 = vmatprep.mubr.bf16.mxu0 0
        %382 = vmatmul.mubr.bf16.gmra.mrb[0].mxu0 %v307
        %v383 = vpop.f32.mrb[0].mxu0
        %v384 = vadd.f32 0.0, %v383
        %v385 = vpop.f32.mrb[0].mxu0
        %v386 = vpop.f32.mrb[0].mxu0
        %v387 = vadd.f32 0.0, %v386
        %v388 = vpop.f32.mrb[0].mxu0
        %389 = vmatprep.mubr.bf16.mxu0 0
        %390 = vmatmul.mubr.bf16.gmra.mrb[0].mxu0 %v310
        %v391 = vpop.f32.mrb[0].mxu0
        %v392 = vadd.f32 0.0, %v391
        %v393 = vpop.f32.mrb[0].mxu0
        %v394 = vpop.f32.mrb[0].mxu0
        %v395 = vadd.f32 0.0, %v394
        %v396 = vpop.f32.mrb[0].mxu0
        %397 = vmatprep.mubr.bf16.mxu0 0
        %398 = vmatmul.mubr.bf16.gmra.mrb[0].mxu0 %v313
        %v399 = vpop.f32.mrb[0].mxu0
        %v400 = vadd.f32 0.0, %v399
        %v401 = vpop.f32.mrb[0].mxu0
        %v402 = vpop.f32.mrb[0].mxu0
        %v403 = vadd.f32 0.0, %v402
        %v404 = vpop.f32.mrb[0].mxu0
        %405 = vmatprep.mubr.bf16.mxu0 0
        %406 = vmatmul.mubr.bf16.gmra.mrb[0].mxu0 %v316
        %v407 = vpop.f32.mrb[0].mxu0
        %v408 = vadd.f32 0.0, %v407
        %v409 = vpop.f32.mrb[0].mxu0
        %v410 = vpop.f32.mrb[0].mxu0
        %v411 = vadd.f32 0.0, %v410
        %v412 = vpop.f32.mrb[0].mxu0
        %413 = vmatprep.mubr.bf16.mxu0 0
        %414 = vmatmul.mubr.bf16.gmra.mrb[0].mxu0 %v319
        %v415 = vpop.f32.mrb[0].mxu0
        %v416 = vadd.f32 0.0, %v415
        %v417 = vpop.f32.mrb[0].mxu0
        %v418 = vpop.f32.mrb[0].mxu0
        %v419 = vadd.f32 0.0, %v418
        %v420 = vpop.f32.mrb[0].mxu0
        %421 = vdwg.mxu0
        %v425 = vunpack.c.l.b16 %v280
        %v426 = vunpack.c.l.b16 %v281
        %v427 = vunpack.c.l.b16 %v282
        %v428 = vpack.c.b16 %v426, %v425
        %v429 = vpack.c.b16 %v427, %v427
        %v432 = vsel %vm321, %v429, 0
        %434 = vmatprep.subr.bf16.mxu0 0
        %435 = vmatpush1.bf16.msra.mxu0 %v428
        %436 = vmatprep.subr.bf16.mxu0 0
        %437 = vmatpush1.bf16.msra.mxu0 %v432
        %438 = vmatprep.subr.bf16.mxu0 0
        %439 = vmatpush1.bf16.msra.mxu0 0
        %440 = vmatprep.subr.bf16.mxu0 0
        %441 = vmatpush1.bf16.msra.mxu0 0
        %442 = vmatprep.subr.bf16.mxu0 0
        %443 = vmatpush1.bf16.msra.mxu0 0
        %444 = vmatprep.subr.bf16.mxu0 0
        %445 = vmatpush1.bf16.msra.mxu0 0
        %446 = vmatprep.subr.bf16.mxu0 0
        %447 = vmatpush1.bf16.msra.mxu0 0
        %448 = vmatprep.subr.bf16.mxu0 0
        %449 = vmatpush1.bf16.msra.mxu0 0
        %450 = vmatprep.subr.bf16.mxu0 0
        %451 = vmatpush1.bf16.msra.mxu0 0
        %452 = vmatprep.subr.bf16.mxu0 0
        %453 = vmatpush1.bf16.msra.mxu0 0
        %454 = vmatprep.subr.bf16.mxu0 0
        %455 = vmatpush1.bf16.msra.mxu0 0
        %456 = vmatprep.subr.bf16.mxu0 0
        %457 = vmatpush1.bf16.msra.mxu0 0
        %458 = vmatprep.subr.bf16.mxu0 0
        %459 = vmatpush1.bf16.msra.mxu0 0
        %460 = vmatprep.subr.bf16.mxu0 0
        %461 = vmatpush1.bf16.msra.mxu0 0
        %462 = vmatprep.subr.bf16.mxu0 0
        %463 = vmatpush1.bf16.msra.mxu0 0
        %464 = vmatprep.subr.bf16.mxu0 0
        %465 = vmatpush1.bf16.msra.mxu0 0
        %466 = vmatprep.mubr.bf16.mxu0 0
        %467 = vmatmul.mubr.bf16.gmra.mrb[0].mxu0 %v298
        %v468 = vpop.f32.mrb[0].mxu0
        %v469 = vadd.f32 %v360, %v468
        %v470 = vpop.f32.mrb[0].mxu0
        %v471 = vpop.f32.mrb[0].mxu0
        %v472 = vadd.f32 %v363, %v471
        %v473 = vpop.f32.mrb[0].mxu0
        %474 = vmatprep.mubr.bf16.mxu0 0
        %475 = vmatmul.mubr.bf16.gmra.mrb[0].mxu0 %v301
        %v476 = vpop.f32.mrb[0].mxu0
        %v477 = vadd.f32 %v368, %v476
        %v478 = vpop.f32.mrb[0].mxu0
        %v479 = vpop.f32.mrb[0].mxu0
        %v480 = vadd.f32 %v371, %v479
        %v481 = vpop.f32.mrb[0].mxu0
        %482 = vmatprep.mubr.bf16.mxu0 0
        %483 = vmatmul.mubr.bf16.gmra.mrb[0].mxu0 %v304
        %v484 = vpop.f32.mrb[0].mxu0
        %v485 = vadd.f32 %v376, %v484
        %v486 = vpop.f32.mrb[0].mxu0
        %v487 = vpop.f32.mrb[0].mxu0
        %v488 = vadd.f32 %v379, %v487
        %v489 = vpop.f32.mrb[0].mxu0
        %490 = vmatprep.mubr.bf16.mxu0 0
        %491 = vmatmul.mubr.bf16.gmra.mrb[0].mxu0 %v307
        %v492 = vpop.f32.mrb[0].mxu0
        %v493 = vadd.f32 %v384, %v492
        %v494 = vpop.f32.mrb[0].mxu0
        %v495 = vpop.f32.mrb[0].mxu0
        %v496 = vadd.f32 %v387, %v495
        %v497 = vpop.f32.mrb[0].mxu0
        %498 = vmatprep.mubr.bf16.mxu0 0
        %499 = vmatmul.mubr.bf16.gmra.mrb[0].mxu0 %v310
        %v500 = vpop.f32.mrb[0].mxu0
        %v501 = vadd.f32 %v392, %v500
        %v502 = vpop.f32.mrb[0].mxu0
        %v503 = vpop.f32.mrb[0].mxu0
        %v504 = vadd.f32 %v395, %v503
        %v505 = vpop.f32.mrb[0].mxu0
        %506 = vmatprep.mubr.bf16.mxu0 0
        %507 = vmatmul.mubr.bf16.gmra.mrb[0].mxu0 %v313
        %v508 = vpop.f32.mrb[0].mxu0
        %v509 = vadd.f32 %v400, %v508
        %v510 = vpop.f32.mrb[0].mxu0
        %v511 = vpop.f32.mrb[0].mxu0
        %v512 = vadd.f32 %v403, %v511
        %v513 = vpop.f32.mrb[0].mxu0
        %514 = vmatprep.mubr.bf16.mxu0 0
        %515 = vmatmul.mubr.bf16.gmra.mrb[0].mxu0 %v316
        %v516 = vpop.f32.mrb[0].mxu0
        %v517 = vadd.f32 %v408, %v516
        %v518 = vpop.f32.mrb[0].mxu0
        %v519 = vpop.f32.mrb[0].mxu0
        %v520 = vadd.f32 %v411, %v519
        %v521 = vpop.f32.mrb[0].mxu0
        %522 = vmatprep.mubr.bf16.mxu0 0
        %523 = vmatmul.mubr.bf16.gmra.mrb[0].mxu0 %v319
        %v524 = vpop.f32.mrb[0].mxu0
        %v525 = vadd.f32 %v416, %v524
        %v526 = vpop.f32.mrb[0].mxu0
        %v527 = vpop.f32.mrb[0].mxu0
        %v528 = vadd.f32 %v419, %v527
        %v529 = vpop.f32.mrb[0].mxu0
        %530 = vdwg.mxu0
        %s531 = scalar_lea.vmem %s1, 24
        %v532 = vld [vmem:[%s531] sm:$0xf]
        %v533 = vld [vmem:[%s531 + $0x4] sm:$0xf]
        %v534 = vld [vmem:[%s531 + $0x8] sm:$0x1]
        %v538 = vunpack.c.l.b16 %v532
        %v539 = vunpack.c.l.b16 %v533
        %v540 = vunpack.c.l.b16 %v534
        %v541 = vpack.c.b16 %v539, %v538
        %v542 = vpack.c.b16 %v540, %v540
        %v545 = vsel %vm321, %v542, 0
        %547 = vmatprep.subr.bf16.mxu0 0
        %548 = vmatpush1.bf16.msra.mxu0 %v541
        %549 = vmatprep.subr.bf16.mxu0 0
        %550 = vmatpush1.bf16.msra.mxu0 %v545
        %551 = vmatprep.subr.bf16.mxu0 0
        %552 = vmatpush1.bf16.msra.mxu0 0
        %553 = vmatprep.subr.bf16.mxu0 0
        %554 = vmatpush1.bf16.msra.mxu0 0
        %555 = vmatprep.subr.bf16.mxu0 0
        %556 = vmatpush1.bf16.msra.mxu0 0
        %557 = vmatprep.subr.bf16.mxu0 0
        %558 = vmatpush1.bf16.msra.mxu0 0
        %559 = vmatprep.subr.bf16.mxu0 0
        %560 = vmatpush1.bf16.msra.mxu0 0
        %561 = vmatprep.subr.bf16.mxu0 0
        %562 = vmatpush1.bf16.msra.mxu0 0
        %563 = vmatprep.subr.bf16.mxu0 0
        %564 = vmatpush1.bf16.msra.mxu0 0
        %565 = vmatprep.subr.bf16.mxu0 0
        %566 = vmatpush1.bf16.msra.mxu0 0
        %567 = vmatprep.subr.bf16.mxu0 0
        %568 = vmatpush1.bf16.msra.mxu0 0
        %569 = vmatprep.subr.bf16.mxu0 0
        %570 = vmatpush1.bf16.msra.mxu0 0
        %571 = vmatprep.subr.bf16.mxu0 0
        %572 = vmatpush1.bf16.msra.mxu0 0
        %573 = vmatprep.subr.bf16.mxu0 0
        %574 = vmatpush1.bf16.msra.mxu0 0
        %575 = vmatprep.subr.bf16.mxu0 0
        %576 = vmatpush1.bf16.msra.mxu0 0
        %577 = vmatprep.subr.bf16.mxu0 0
        %578 = vmatpush1.bf16.msra.mxu0 0
        %579 = vmatprep.mubr.bf16.mxu0 0
        %580 = vmatmul.mubr.bf16.gmra.mrb[0].mxu0 %v298
        %v581 = vpop.f32.mrb[0].mxu0
        %v582 = vadd.f32 0.0, %v581
        %v583 = vpop.f32.mrb[0].mxu0
        %v584 = vpop.f32.mrb[0].mxu0
        %v585 = vadd.f32 0.0, %v584
        %v586 = vpop.f32.mrb[0].mxu0
        %587 = vmatprep.mubr.bf16.mxu0 0
        %588 = vmatmul.mubr.bf16.gmra.mrb[0].mxu0 %v301
        %v589 = vpop.f32.mrb[0].mxu0
        %v590 = vadd.f32 0.0, %v589
        %v591 = vpop.f32.mrb[0].mxu0
        %v592 = vpop.f32.mrb[0].mxu0
        %v593 = vadd.f32 0.0, %v592
        %v594 = vpop.f32.mrb[0].mxu0
        %595 = vmatprep.mubr.bf16.mxu0 0
        %596 = vmatmul.mubr.bf16.gmra.mrb[0].mxu0 %v304
        %v597 = vpop.f32.mrb[0].mxu0
        %v598 = vadd.f32 0.0, %v597
        %v599 = vpop.f32.mrb[0].mxu0
        %v600 = vpop.f32.mrb[0].mxu0
        %v601 = vadd.f32 0.0, %v600
        %v602 = vpop.f32.mrb[0].mxu0
        %603 = vmatprep.mubr.bf16.mxu0 0
        %604 = vmatmul.mubr.bf16.gmra.mrb[0].mxu0 %v307
        %v605 = vpop.f32.mrb[0].mxu0
        %v606 = vadd.f32 0.0, %v605
        %v607 = vpop.f32.mrb[0].mxu0
        %v608 = vpop.f32.mrb[0].mxu0
        %v609 = vadd.f32 0.0, %v608
        %v610 = vpop.f32.mrb[0].mxu0
        %611 = vmatprep.mubr.bf16.mxu0 0
        %612 = vmatmul.mubr.bf16.gmra.mrb[0].mxu0 %v310
        %v613 = vpop.f32.mrb[0].mxu0
        %v614 = vadd.f32 0.0, %v613
        %v615 = vpop.f32.mrb[0].mxu0
        %v616 = vpop.f32.mrb[0].mxu0
        %v617 = vadd.f32 0.0, %v616
        %v618 = vpop.f32.mrb[0].mxu0
        %619 = vmatprep.mubr.bf16.mxu0 0
        %620 = vmatmul.mubr.bf16.gmra.mrb[0].mxu0 %v313
        %v621 = vpop.f32.mrb[0].mxu0
        %v622 = vadd.f32 0.0, %v621
        %v623 = vpop.f32.mrb[0].mxu0
        %v624 = vpop.f32.mrb[0].mxu0
        %v625 = vadd.f32 0.0, %v624
        %v626 = vpop.f32.mrb[0].mxu0
        %627 = vmatprep.mubr.bf16.mxu0 0
        %628 = vmatmul.mubr.bf16.gmra.mrb[0].mxu0 %v316
        %v629 = vpop.f32.mrb[0].mxu0
        %v630 = vadd.f32 0.0, %v629
        %v631 = vpop.f32.mrb[0].mxu0
        %v632 = vpop.f32.mrb[0].mxu0
        %v633 = vadd.f32 0.0, %v632
        %v634 = vpop.f32.mrb[0].mxu0
        %635 = vmatprep.mubr.bf16.mxu0 0
        %636 = vmatmul.mubr.bf16.gmra.mrb[0].mxu0 %v319
        %v637 = vpop.f32.mrb[0].mxu0
        %v638 = vadd.f32 0.0, %v637
        %v639 = vpop.f32.mrb[0].mxu0
        %v640 = vpop.f32.mrb[0].mxu0
        %v641 = vadd.f32 0.0, %v640
        %v642 = vpop.f32.mrb[0].mxu0
        %643 = vdwg.mxu0
        %v644 = vadd.f32 %v469, %v582
        %v645 = vadd.f32 %v472, %v585
        %v646 = vadd.f32 %v477, %v590
        %v647 = vadd.f32 %v480, %v593
        %v648 = vadd.f32 %v485, %v598
        %v649 = vadd.f32 %v488, %v601
        %v650 = vadd.f32 %v493, %v606
        %v651 = vadd.f32 %v496, %v609
        %v652 = vadd.f32 %v501, %v614
        %v653 = vadd.f32 %v504, %v617
        %v654 = vadd.f32 %v509, %v622
        %v655 = vadd.f32 %v512, %v625
        %v656 = vadd.f32 %v517, %v630
        %v657 = vadd.f32 %v520, %v633
        %v658 = vadd.f32 %v525, %v638
        %v659 = vadd.f32 %v528, %v641
        %664 = vrot.lane.b32.xlu0 %v648, 32
        %v665 = vpop.permute.xlu0 %664
        %666 = vrot.lane.b32.xlu0 %v649, 32
        %v667 = vpop.permute.xlu0 %666
        %668 = vrot.lane.b32.xlu0 %v650, 32
        %v669 = vpop.permute.xlu0 %668
        %670 = vrot.lane.b32.xlu0 %v651, 32
        %v671 = vpop.permute.xlu0 %670
        %v676 = vmul.f32 %v644, %v665
        %v677 = vmul.f32 %v645, %v667
        %v678 = vmul.f32 %v646, %v669
        %v679 = vmul.f32 %v647, %v671
        %684 = vrot.lane.b32.xlu0 %v652, 64
        %v685 = vpop.permute.xlu0 %684
        %686 = vrot.lane.b32.xlu0 %v653, 64
        %v687 = vpop.permute.xlu0 %686
        %688 = vrot.lane.b32.xlu0 %v654, 64
        %v689 = vpop.permute.xlu0 %688
        %690 = vrot.lane.b32.xlu0 %v655, 64
        %v691 = vpop.permute.xlu0 %690
        %v696 = vmul.f32 %v644, %v685
        %v697 = vmul.f32 %v645, %v687
        %v698 = vmul.f32 %v646, %v689
        %v699 = vmul.f32 %v647, %v691
        %704 = vrot.lane.b32.xlu0 %v656, 96
        %v705 = vpop.permute.xlu0 %704
        %706 = vrot.lane.b32.xlu0 %v657, 96
        %v707 = vpop.permute.xlu0 %706
        %708 = vrot.lane.b32.xlu0 %v658, 96
        %v709 = vpop.permute.xlu0 %708
        %710 = vrot.lane.b32.xlu0 %v659, 96
        %v711 = vpop.permute.xlu0 %710
        %v716 = vmul.f32 %v644, %v705
        %v717 = vmul.f32 %v645, %v707
        %v718 = vmul.f32 %v646, %v709
        %v719 = vmul.f32 %v647, %v711
        %720 = vrot.lane.b32.xlu0 %v652, 32
        %v721 = vpop.permute.xlu0 %720
        %722 = vrot.lane.b32.xlu0 %v653, 32
        %v723 = vpop.permute.xlu0 %722
        %724 = vrot.lane.b32.xlu0 %v654, 32
        %v725 = vpop.permute.xlu0 %724
        %726 = vrot.lane.b32.xlu0 %v655, 32
        %v727 = vpop.permute.xlu0 %726
        %v732 = vmul.f32 %v648, %v721
        %v733 = vmul.f32 %v649, %v723
        %v734 = vmul.f32 %v650, %v725
        %v735 = vmul.f32 %v651, %v727
        %736 = vrot.lane.b32.xlu0 %v656, 64
        %v737 = vpop.permute.xlu0 %736
        %738 = vrot.lane.b32.xlu0 %v657, 64
        %v739 = vpop.permute.xlu0 %738
        %740 = vrot.lane.b32.xlu0 %v658, 64
        %v741 = vpop.permute.xlu0 %740
        %742 = vrot.lane.b32.xlu0 %v659, 64
        %v743 = vpop.permute.xlu0 %742
        %v748 = vmul.f32 %v648, %v737
        %v749 = vmul.f32 %v649, %v739
        %v750 = vmul.f32 %v650, %v741
        %v751 = vmul.f32 %v651, %v743
        %752 = vrot.lane.b32.xlu0 %v656, 32
        %v753 = vpop.permute.xlu0 %752
        %754 = vrot.lane.b32.xlu0 %v657, 32
        %v755 = vpop.permute.xlu0 %754
        %756 = vrot.lane.b32.xlu0 %v658, 32
        %v757 = vpop.permute.xlu0 %756
        %758 = vrot.lane.b32.xlu0 %v659, 32
        %v759 = vpop.permute.xlu0 %758
        %v764 = vmul.f32 %v652, %v753
        %v765 = vmul.f32 %v653, %v755
        %v766 = vmul.f32 %v654, %v757
        %v767 = vmul.f32 %v655, %v759
        %772 = vrot.lane.b32.xlu0 %v676, 96
        %v773 = vpop.permute.xlu0 %772
        %774 = vrot.lane.b32.xlu0 %v677, 96
        %v775 = vpop.permute.xlu0 %774
        %776 = vrot.lane.b32.xlu0 %v678, 96
        %v777 = vpop.permute.xlu0 %776
        %778 = vrot.lane.b32.xlu0 %v679, 96
        %v779 = vpop.permute.xlu0 %778
        %788 = vrot.lane.b32.xlu0 %v696, 96
        %v789 = vpop.permute.xlu0 %788
        %790 = vrot.lane.b32.xlu0 %v697, 96
        %v791 = vpop.permute.xlu0 %790
        %792 = vrot.lane.b32.xlu0 %v698, 96
        %v793 = vpop.permute.xlu0 %792
        %794 = vrot.lane.b32.xlu0 %v699, 96
        %v795 = vpop.permute.xlu0 %794
        %804 = vrot.lane.b32.xlu0 %v716, 96
        %v805 = vpop.permute.xlu0 %804
        %806 = vrot.lane.b32.xlu0 %v717, 96
        %v807 = vpop.permute.xlu0 %806
        %808 = vrot.lane.b32.xlu0 %v718, 96
        %v809 = vpop.permute.xlu0 %808
        %810 = vrot.lane.b32.xlu0 %v719, 96
        %v811 = vpop.permute.xlu0 %810
        %820 = vrot.lane.b32.xlu0 %v732, 32
        %v821 = vpop.permute.xlu0 %820
        %822 = vrot.lane.b32.xlu0 %v733, 32
        %v823 = vpop.permute.xlu0 %822
        %824 = vrot.lane.b32.xlu0 %v734, 32
        %v825 = vpop.permute.xlu0 %824
        %826 = vrot.lane.b32.xlu0 %v735, 32
        %v827 = vpop.permute.xlu0 %826
        %836 = vrot.lane.b32.xlu0 %v748, 32
        %v837 = vpop.permute.xlu0 %836
        %838 = vrot.lane.b32.xlu0 %v749, 32
        %v839 = vpop.permute.xlu0 %838
        %840 = vrot.lane.b32.xlu0 %v750, 32
        %v841 = vpop.permute.xlu0 %840
        %842 = vrot.lane.b32.xlu0 %v751, 32
        %v843 = vpop.permute.xlu0 %842
        %852 = vrot.lane.b32.xlu0 %v764, 64
        %v853 = vpop.permute.xlu0 %852
        %854 = vrot.lane.b32.xlu0 %v765, 64
        %v855 = vpop.permute.xlu0 %854
        %856 = vrot.lane.b32.xlu0 %v766, 64
        %v857 = vpop.permute.xlu0 %856
        %858 = vrot.lane.b32.xlu0 %v767, 64
        %v859 = vpop.permute.xlu0 %858
        %vm864 = vcmask 261120
        %v865 = vsel %vm864, %v773, %v789
        %v866 = vsel %vm864, %v775, %v791
        %v867 = vsel %vm864, %v777, %v793
        %v868 = vsel %vm864, %v779, %v795
        %vm869 = vcmask 523264
        %v870 = vsel %vm869, %v865, %v805
        %v871 = vsel %vm869, %v866, %v807
        %v872 = vsel %vm869, %v867, %v809
        %v873 = vsel %vm869, %v868, %v811
        %vm874 = vcmask 785408
        %v875 = vsel %vm874, %v870, %v821
        %v876 = vsel %vm874, %v871, %v823
        %v877 = vsel %vm874, %v872, %v825
        %v878 = vsel %vm874, %v873, %v827
        %v879 = vsel %vm864, %v837, %v853
        %v880 = vsel %vm864, %v839, %v855
        %v881 = vsel %vm864, %v841, %v857
        %v882 = vsel %vm864, %v843, %v859
        %883 = vst [vmem:[%s137] sm:$0xff] %v875
        %884 = vst.msk [vmem:[%s137 + $0x8] sm:$0xff] %vm869, %v879
        %885 = vst [vmem:[%s137 + $0x10] sm:$0xff] %v876
        %886 = vst.msk [vmem:[%s137 + $0x18] sm:$0xff] %vm869, %v880
        %887 = vst [vmem:[%s137 + $0x20] sm:$0xff] %v877
        %888 = vst.msk [vmem:[%s137 + $0x28] sm:$0xff] %vm869, %v881
        %889 = vst [vmem:[%s137 + $0x30] sm:$0xff] %v878
        %890 = vst.msk [vmem:[%s137 + $0x38] sm:$0xff] %vm869, %v882
        %s891 = sand.u32 %s71, 1
        %s892 = scalar_lea.sflag [#allocation3], %s891
        %s893 = sand.u32 %s71, 1
        %s894 = smul.addr %s893, 64
        %s895 = scalar_lea.vmem [#allocation2], %s894
        // Predicated region
        $region29: #{tpu_custom_call.1} parent=27 // pred_check
          %p896 = pneg %p81
        $region30: #{tpu_custom_call.1} parent=27 // pred_check_branch
          %898 = sbr.rel (%p896) target = $region32
        $region31: #{tpu_custom_call.1} parent=27 // pred_region
          %s899 = smul.u32 4, %s16
          %s901 = ssub.s32 1024, 1024
          %902 = vsyncadd %s892, %s901
          %s903 = smul.addr %s899, 2
          %s904 = smul.addr %s903, 128
          %s905 = scalar_lea.hbm %s2, %s904
          %s906 = sshll.u32 %s895, 4
          %s907 = int_to_ptr.vmem [resolvable:$true] %s906
          %912 = dma.vmem_to_hbm [thread:$0]  %s907, 1024, %s905, %s892, 256, 256, 16
        $region32: #{tpu_custom_call.1} parent=27 // pred_fallthru
          _
      $region28: #{tpu_custom_call.1} parent=5 // pred_fallthru
        _
      %p913 = scmp.le.s32.totalorder 2, %s11
      // Predicated region
      $region33: #{tpu_custom_call.1} parent=5 // pred_check
        %p914 = pneg %p913
      $region34: #{tpu_custom_call.1} parent=5 // pred_check_branch
        %916 = sbr.rel (%p914) target = $region36
      $region35: #{tpu_custom_call.1} parent=5 // pred_region
        %s917 = ssub.s32 %s11, 2
        // Predicated region
        $region37: #{tpu_custom_call.1} parent=35 // pred_check
          %p918 = pneg %p87
        $region38: #{tpu_custom_call.1} parent=35 // pred_check_branch
          %920 = sbr.rel (%p918) target = $region40
        $region39: #{tpu_custom_call.1} parent=35 // pred_region
          %s921 = sand.u32 %s72, 1
          %s922 = scalar_lea.sflag [#allocation3], %s921
          %s923 = sand.u32 %s72, 1
          %s924 = smul.addr %s923, 64
          %s925 = scalar_lea.vmem [#allocation2], %s924
          %926 = dma.done %s922, 1024
        $region40: #{tpu_custom_call.1} parent=35 // pred_fallthru
          _
      $region36: #{tpu_custom_call.1} parent=5 // pred_fallthru
        _
    $region6: #{tpu_custom_call.1} parent=1 // loop_footer
      %s15 = sadd.s32 1, %s11
    $region7: #{tpu_custom_call.1} parent=1 // loop_footer_branch
      %10 = sbr.rel target = $region3
    $region8: #{tpu_custom_call.1} parent=1 // loop_exit
      _
    %927 = vsyncpa [#allocation3], 1
    %s928 = scalar_lea.sflag [#allocation3], 1
    %929 = vsyncpa %s928, 1

</llo_original>
